<compile_context>
chip_gen: v5e
topology: v5e:2x2
jax: 0.10.0
libtpu: 0.0.40
codegen_flags: <defaults>
</compile_context>

<pallas_src>
import functools
import math

import jax
import jax.numpy as jnp
from jax.experimental import pallas as pl
from jax.experimental.pallas import tpu as pltpu

LANES = 128
SUBLANES = 8
GRANULE = SUBLANES * LANES   # 1024: minimal flat pad so (rows, 128) is legal
MAX_ROW_TILE = 2048          # 2048x128 f32 = 1 MiB / input / buffer
MAX_CORES = 2                # v7x megacore; extra serial step on v5e/v6e is harmless


def _mape_kernel(p_ref, l_ref, sum_ref, cnt_ref, *,
                 row_tile, chunks_per_core, total_chunks,
                 valid_rows_last, has_inactive):
    c = pl.program_id(0)            # core (parallel) axis
    j = pl.program_id(1)            # reduction (arbitrary) axis
    blk = c * chunks_per_core + j   # global chunk id (scalar)

    # Output blocks stay resident across the j axis -> they ARE the accumulators.
    @pl.when(j == 0)
    def _():
        sum_ref[...] = jnp.zeros_like(sum_ref)
        cnt_ref[...] = jnp.zeros_like(cnt_ref)

    def accumulate(limit_rows):
        preds = p_ref[...].astype(jnp.float32)
        labels = l_ref[...].astype(jnp.float32)
        mask = labels != 0.0                      # zero-padded tail masked for free
        if limit_rows is not None:                # only the ragged last chunk (static)
            rid = jax.lax.broadcasted_iota(jnp.int32, (row_tile, LANES), 0)
            mask = jnp.logical_and(mask, rid < limit_rows)
        denom = jnp.where(mask, jnp.abs(labels), 1.0)
        # EUP reciprocal (otherwise idle slot) + one Newton step (~1e-6 rel err).
        r = pl.reciprocal(denom, approx=True)
        r = r * (2.0 - denom * r)
        dist = jnp.where(mask, jnp.abs(preds - labels) * r, 0.0)
        ones = jnp.where(mask, 1.0, 0.0)

        # Fold the tile down to one (8, 128) vreg with vreg-wise adds (no XLU),
        # then a single read-modify-write of the small resident accumulator.
        def fold(t):
            return t.reshape(row_tile // SUBLANES, SUBLANES, LANES).sum(axis=0)

        sum_ref[...] += fold(dist)
        cnt_ref[...] += fold(ones)

    partial_last = valid_rows_last != row_tile    # static Python bool

    if partial_last:
        # Boundary chunk: extra row mask for the out-of-bounds rows of the block.
        @pl.when(blk == total_chunks - 1)
        def _():
            accumulate(valid_rows_last)

    if partial_last:
        interior = blk < total_chunks - 1
    elif has_inactive:
        interior = blk < total_chunks
    else:
        interior = None

    if interior is None:
        # Every grid step maps to a full, valid chunk: no gating at all.
        accumulate(None)
    else:
        @pl.when(interior)
        def _():
            accumulate(None)


def mape_loss(preds: jax.Array, labels: jax.Array) -> jax.Array:
    """Pallas implementation of MapeLoss.forward: mean(|p-l|/|l| over l != 0)."""
    assert preds.shape == labels.shape
    n = math.prod(preds.shape)
    p = preds.reshape(-1)
    l = labels.reshape(-1)

    # Minimal pad so the flat length reshapes to (rows, 128) with rows % 8 == 0.
    # Padded labels are zero, so `labels != 0` excludes them automatically.
    n_pad = (-n) % GRANULE
    if n_pad:
        p = jnp.pad(p, (0, n_pad))
        l = jnp.pad(l, (0, n_pad))
    rows = (n + n_pad) // LANES

    row_tile = min(MAX_ROW_TILE, rows)
    total_chunks = -(-rows // row_tile)
    ncores = min(MAX_CORES, total_chunks)
    chunks_per_core = -(-total_chunks // ncores)
    has_inactive = ncores * chunks_per_core != total_chunks
    valid_rows_last = rows - (total_chunks - 1) * row_tile

    p2 = p.reshape(rows, LANES)
    l2 = l.reshape(rows, LANES)

    if has_inactive:
        # Clamp keeps the DMA in bounds; the duplicated chunk does no compute.
        def in_idx(c, j):
            return (jnp.minimum(c * chunks_per_core + j, total_chunks - 1), 0)
    else:
        def in_idx(c, j):
            return (c * chunks_per_core + j, 0)

    kernel = functools.partial(
        _mape_kernel,
        row_tile=row_tile,
        chunks_per_core=chunks_per_core,
        total_chunks=total_chunks,
        valid_rows_last=valid_rows_last,
        has_inactive=has_inactive,
    )

    sum_p, cnt_p = pl.pallas_call(
        kernel,
        out_shape=(
            jax.ShapeDtypeStruct((ncores * SUBLANES, LANES), jnp.float32),
            jax.ShapeDtypeStruct((ncores * SUBLANES, LANES), jnp.float32),
        ),
        grid_spec=pltpu.PrefetchScalarGridSpec(
            num_scalar_prefetch=0,
            grid=(ncores, chunks_per_core),
            in_specs=[
                pl.BlockSpec((row_tile, LANES), in_idx),
                pl.BlockSpec((row_tile, LANES), in_idx),
            ],
            out_specs=(
                pl.BlockSpec((SUBLANES, LANES), lambda c, j: (c, 0)),
                pl.BlockSpec((SUBLANES, LANES), lambda c, j: (c, 0)),
            ),
        ),
        compiler_params=pltpu.CompilerParams(
            dimension_semantics=("parallel", "arbitrary"),
        ),
    )(p2, l2)

    # Tiny final combine + divide in plain JAX (count == 0 -> NaN, as in torch).
    return jnp.sum(sum_p) / jnp.sum(cnt_p)


if __name__ == "__main__":
    key = jax.random.PRNGKey(0)
    k1, k2 = jax.random.split(key)

    def ref_mape(p, l):
        m = l != 0.0
        d = jnp.where(m, jnp.abs(p - l) / jnp.abs(jnp.where(m, l, 1.0)), 0.0)
        return jnp.sum(d) / jnp.sum(m)

    # Small shapes consistent with a generic regression target: (batch, C, H, W)
    shape = (2, 4, 16, 16)
    preds = jax.random.normal(k1, shape, dtype=jnp.float32)
    labels = jax.random.normal(k2, shape, dtype=jnp.float32)
    labels = jnp.where(jnp.abs(labels) < 0.2, 0.0, labels)   # exercise labels == 0
    # Exercise preds == labels == 0 (0/0) lanes that the mask must drop cleanly.
    preds = preds.at[0, 0, 0, :4].set(0.0)
    labels = labels.at[0, 0, 0, :4].set(0.0)

    loss = mape_loss(preds, labels)
    jax.block_until_ready(loss)
    ref = ref_mape(preds, labels)
    assert jnp.allclose(loss, ref, rtol=1e-4, atol=1e-6), (loss, ref)

    # Second check: awkward size exercising the multi-chunk / 2-core /
    # ragged-last-chunk / inactive-duplicate paths (5112 rows -> 3 chunks of 2048).
    k3, k4 = jax.random.split(k2)
    shape2 = (5, 517, 253)
    p_big = jax.random.normal(k3, shape2, dtype=jnp.float32)
    l_big = jax.random.normal(k4, shape2, dtype=jnp.float32)
    l_big = jnp.where(jnp.abs(l_big) < 0.1, 0.0, l_big)
    loss2 = mape_loss(p_big, l_big)
    jax.block_until_ready(loss2)
    ref2 = ref_mape(p_big, l_big)
    assert jnp.allclose(loss2, ref2, rtol=1e-4, atol=1e-6), (loss2, ref2)

    print("KERNEL_OK")
</pallas_src>

<mosaic_0001>
module attributes {stable_mosaic.version = 11 : i64} {
  func.func @_mape_kernel(%arg0: i32, %arg1: i32, %arg2: memref<16x128xf32, #tpu.memory_space<vmem>>, %arg3: memref<16x128xf32, #tpu.memory_space<vmem>>, %arg4: memref<8x128xf32, #tpu.memory_space<vmem>>, %arg5: memref<8x128xf32, #tpu.memory_space<vmem>>) attributes {dimension_semantics = [#tpu.dimension_semantics<parallel>, #tpu.dimension_semantics<arbitrary>], iteration_bounds = array<i64: 1, 1>, scalar_prefetch = 0 : i64, scratch_operands = 0 : i64, tpu.core_type = #tpu.core_type<tc>, window_params = [{transform_indices = @transform_0, window_bounds = array<i64: 16, 128>}, {transform_indices = @transform_1, window_bounds = array<i64: 16, 128>}, {transform_indices = @transform_2, window_bounds = array<i64: 8, 128>}, {transform_indices = @transform_3, window_bounds = array<i64: 8, 128>}]} {
    %c0_i32 = arith.constant 0 : i32
    %0 = arith.cmpi eq, %arg1, %c0_i32 : i32
    %1 = arith.extui %0 : i1 to i32
    %c0_i32_0 = arith.constant 0 : i32
    %2 = arith.cmpi ne, %1, %c0_i32_0 : i32
    scf.if %2 {
      %cst_19 = arith.constant 0.000000e+00 : f32
      %33 = vector.broadcast %cst_19 : f32 to vector<8x128xf32>
      %c0_20 = arith.constant 0 : index
      %c0_21 = arith.constant 0 : index
      %34 = vector.load %arg4[%c0_20, %c0_21] : memref<8x128xf32, #tpu.memory_space<vmem>>, vector<8x128xf32>
      tpu.vector_store %arg4[%c0_20, %c0_21], %33 {strides = array<i32>} : memref<8x128xf32, #tpu.memory_space<vmem>>, vector<8x128xf32>,
      %cst_22 = arith.constant 0.000000e+00 : f32
      %35 = vector.broadcast %cst_22 : f32 to vector<8x128xf32>
      %c0_23 = arith.constant 0 : index
      %c0_24 = arith.constant 0 : index
      %36 = vector.load %arg5[%c0_23, %c0_24] : memref<8x128xf32, #tpu.memory_space<vmem>>, vector<8x128xf32>
      tpu.vector_store %arg5[%c0_23, %c0_24], %35 {strides = array<i32>} : memref<8x128xf32, #tpu.memory_space<vmem>>, vector<8x128xf32>,
    } else {
    }
    %c0 = arith.constant 0 : index
    %c0_1 = arith.constant 0 : index
    %3 = vector.load %arg2[%c0, %c0_1] : memref<16x128xf32, #tpu.memory_space<vmem>>, vector<16x128xf32>
    %c0_2 = arith.constant 0 : index
    %c0_3 = arith.constant 0 : index
    %4 = vector.load %arg3[%c0_2, %c0_3] : memref<16x128xf32, #tpu.memory_space<vmem>>, vector<16x128xf32>
    %cst = arith.constant 0.000000e+00 : f32
    %5 = vector.broadcast %cst : f32 to vector<16x128xf32>
    %6 = arith.cmpf one, %4, %5 : vector<16x128xf32>
    %7 = math.absf %4 : vector<16x128xf32>
    %cst_4 = arith.constant 1.000000e+00 : f32
    %8 = vector.broadcast %cst_4 : f32 to vector<16x128xf32>
    %9 = arith.select %6, %7, %8 : vector<16x128xi1>, vector<16x128xf32>
    %10 = tpu.reciprocal %9 {approx = true} : vector<16x128xf32> -> vector<16x128xf32>
    %11 = arith.mulf %9, %10 : vector<16x128xf32>
    %cst_5 = arith.constant 2.000000e+00 : f32
    %12 = vector.broadcast %cst_5 : f32 to vector<16x128xf32>
    %13 = arith.subf %12, %11 : vector<16x128xf32>
    %14 = arith.mulf %10, %13 : vector<16x128xf32>
    %15 = arith.subf %3, %4 : vector<16x128xf32>
    %16 = math.absf %15 : vector<16x128xf32>
    %17 = arith.mulf %16, %14 : vector<16x128xf32>
    %cst_6 = arith.constant 0.000000e+00 : f32
    %18 = vector.broadcast %cst_6 : f32 to vector<16x128xf32>
    %19 = arith.select %6, %17, %18 : vector<16x128xi1>, vector<16x128xf32>
    %cst_7 = arith.constant 1.000000e+00 : f32
    %cst_8 = arith.constant 0.000000e+00 : f32
    %20 = vector.broadcast %cst_7 : f32 to vector<16x128xf32>
    %21 = vector.broadcast %cst_8 : f32 to vector<16x128xf32>
    %22 = arith.select %6, %20, %21 : vector<16x128xi1>, vector<16x128xf32>
    %c0_9 = arith.constant 0 : index
    %c0_10 = arith.constant 0 : index
    %23 = vector.load %arg4[%c0_9, %c0_10] : memref<8x128xf32, #tpu.memory_space<vmem>>, vector<8x128xf32>
    %24 = vector.shape_cast %19 : vector<16x128xf32> to vector<2x8x128xf32>
    %cst_11 = arith.constant dense<0.000000e+00> : vector<8x128xf32>
    %25 = vector.multi_reduction <add>, %24, %cst_11 [0] : vector<2x8x128xf32> to vector<8x128xf32>
    %26 = arith.addf %23, %25 : vector<8x128xf32>
    %c0_12 = arith.constant 0 : index
    %c0_13 = arith.constant 0 : index
    %27 = vector.load %arg4[%c0_12, %c0_13] : memref<8x128xf32, #tpu.memory_space<vmem>>, vector<8x128xf32>
    tpu.vector_store %arg4[%c0_12, %c0_13], %26 {strides = array<i32>} : memref<8x128xf32, #tpu.memory_space<vmem>>, vector<8x128xf32>,
    %c0_14 = arith.constant 0 : index
    %c0_15 = arith.constant 0 : index
    %28 = vector.load %arg5[%c0_14, %c0_15] : memref<8x128xf32, #tpu.memory_space<vmem>>, vector<8x128xf32>
    %29 = vector.shape_cast %22 : vector<16x128xf32> to vector<2x8x128xf32>
    %cst_16 = arith.constant dense<0.000000e+00> : vector<8x128xf32>
    %30 = vector.multi_reduction <add>, %29, %cst_16 [0] : vector<2x8x128xf32> to vector<8x128xf32>
    %31 = arith.addf %28, %30 : vector<8x128xf32>
    %c0_17 = arith.constant 0 : index
    %c0_18 = arith.constant 0 : index
    %32 = vector.load %arg5[%c0_17, %c0_18] : memref<8x128xf32, #tpu.memory_space<vmem>>, vector<8x128xf32>
    tpu.vector_store %arg5[%c0_17, %c0_18], %31 {strides = array<i32>} : memref<8x128xf32, #tpu.memory_space<vmem>>, vector<8x128xf32>,
    return
  }
  func.func @transform_0(%arg0: i32, %arg1: i32) -> (i32, i32) {
    %c1_i32 = arith.constant 1 : i32
    %0 = arith.muli %arg0, %c1_i32 : i32
    %1 = arith.addi %0, %arg1 : i32
    %c0_i32 = arith.constant 0 : i32
    %c0_i32_0 = arith.constant 0 : i32
    return %1, %c0_i32 : i32, i32
  }
  func.func @transform_1(%arg0: i32, %arg1: i32) -> (i32, i32) {
    %c1_i32 = arith.constant 1 : i32
    %0 = arith.muli %arg0, %c1_i32 : i32
    %1 = arith.addi %0, %arg1 : i32
    %c0_i32 = arith.constant 0 : i32
    %c0_i32_0 = arith.constant 0 : i32
    return %1, %c0_i32 : i32, i32
  }
  func.func @transform_2(%arg0: i32, %arg1: i32) -> (i32, i32) {
    %c0_i32 = arith.constant 0 : i32
    %c0_i32_0 = arith.constant 0 : i32
    return %arg0, %c0_i32 : i32, i32
  }
  func.func @transform_3(%arg0: i32, %arg1: i32) -> (i32, i32) {
    %c0_i32 = arith.constant 0 : i32
    %c0_i32_0 = arith.constant 0 : i32
    return %arg0, %c0_i32 : i32, i32
  }
}

</mosaic_0001>

<llo_original>
// kernel: tpu_custom_call.1
$region0: #{tpu_custom_call.1}
  #allocation0 [shape = 'u32[]', space=smem, size = 0x4, offset = 0x4, fixed_abs, tag = 'smem constant byte address 0x4 - core index']
  #allocation1 [shape = 'u32[72,128]{1,0:T(1,128)}', space=vmem, size = 0x9000, scoped, tag = 'internal scratch']
  %s0 = inlined_call_operand.hbm [shape: f32[16,128], index: 0, kind: input, shape index: {}]
  %s1 = inlined_call_operand.hbm [shape: f32[16,128], index: 1, kind: input, shape index: {}]
  %s2 = inlined_call_operand.hbm [shape: f32[8,128], index: 2, kind: output, shape index: {0}]
  %s3 = inlined_call_operand.hbm [shape: f32[8,128], index: 3, kind: output, shape index: {1}]
  %4 = xla_tuple %s2, %s3
  %s5 = sld [smem:[#allocation0]]
  $region38: #{tpu_custom_call.1} parent=0
    _
  %s7 = ssub.s32 1, %s5
  %s8 = scalar_select 0, %s7, %s5
  $region1: #{tpu_custom_call.1} parent=0
    #allocation2 [shape = 'u8[8192]{0}', space=vmem, size = 0x2000, scoped, tag = 'input window, operand 0, single buffered']
    #allocation3 [shape = 's32[1]{0}', space=sflag, size = 0x4, scoped, tag = 'scoped memory for tpu_custom_call.1']
    #allocation4 [shape = 's32[1]{0}', space=sflag, size = 0x4, scoped, tag = 'scoped memory for tpu_custom_call.1']
    #allocation5 [shape = 'u8[8192]{0}', space=vmem, size = 0x2000, scoped, tag = 'input window, operand 1, single buffered']
    #allocation6 [shape = 's32[1]{0}', space=sflag, size = 0x4, scoped, tag = 'scoped memory for tpu_custom_call.1']
    #allocation7 [shape = 'u8[4096]{0}', space=vmem, size = 0x1000, scoped, tag = 'output window, operand 0, single buffered']
    #allocation8 [shape = 'u8[4096]{0}', space=vmem, size = 0x1000, scoped, tag = 'output window, operand 1, single buffered']
    #allocation9 [shape = 's32[1]{0}', space=sflag, size = 0x4, scoped, tag = 'scoped memory for tpu_custom_call.1']
    %9 = vsyncpa [#allocation3], 0
    %10 = vsyncpa [#allocation6], 0
    %11 = vsyncpa [#allocation4], 0
    %12 = vsyncpa [#allocation9], 0
    // Predicated region
    $region2: #{tpu_custom_call.1} parent=1 // pred_check
      _
    $region3: #{tpu_custom_call.1} parent=1 // pred_check_branch
      %14 = sbr.rel (0) target = $region5
    $region4: #{tpu_custom_call.1} parent=1 // pred_region
      %s15 = sadd.s32 0, 0
      %s16 = smul.u32 2, %s15
      %18 = vsyncadd [#allocation3], 0
      %s19 = smul.addr %s16, 8
      %s20 = scalar_lea.hbm %s0, %s19
      %s21 = sshll.u32 %s20, 4
      %s22 = int_to_ptr.hbm [resolvable:$true] %s21
      %s23 = sshll.u32 [#allocation2], 4
      %s24 = int_to_ptr.vmem [resolvable:$true] %s23
      %29 = dma.hbm_to_vmem [thread:$0]  %s22, 256, %s24, [#allocation3], 128, 128, 8
    $region5: #{tpu_custom_call.1} parent=1 // pred_fallthru
      _
    // Predicated region
    $region6: #{tpu_custom_call.1} parent=1 // pred_check
      _
    $region7: #{tpu_custom_call.1} parent=1 // pred_check_branch
      %31 = sbr.rel (0) target = $region9
    $region8: #{tpu_custom_call.1} parent=1 // pred_region
      %s32 = sadd.s32 0, 0
      %s33 = smul.u32 2, %s32
      %35 = vsyncadd [#allocation6], 0
      %s36 = smul.addr %s33, 8
      %s37 = scalar_lea.hbm %s1, %s36
      %s38 = sshll.u32 %s37, 4
      %s39 = int_to_ptr.hbm [resolvable:$true] %s38
      %s40 = sshll.u32 [#allocation5], 4
      %s41 = int_to_ptr.vmem [resolvable:$true] %s40
      %46 = dma.hbm_to_vmem [thread:$0]  %s39, 256, %s41, [#allocation6], 128, 128, 8
    $region9: #{tpu_custom_call.1} parent=1 // pred_fallthru
      _
    // Predicated region
    $region10: #{tpu_custom_call.1} parent=1 // pred_check
      _
    $region11: #{tpu_custom_call.1} parent=1 // pred_check_branch
      %48 = sbr.rel (0) target = $region13
    $region12: #{tpu_custom_call.1} parent=1 // pred_region
      %50 = dma.done [#allocation3], 256
    $region13: #{tpu_custom_call.1} parent=1 // pred_fallthru
      _
    // Predicated region
    $region14: #{tpu_custom_call.1} parent=1 // pred_check
      _
    $region15: #{tpu_custom_call.1} parent=1 // pred_check_branch
      %52 = sbr.rel (0) target = $region17
    $region16: #{tpu_custom_call.1} parent=1 // pred_region
      %54 = dma.done [#allocation6], 256
    $region17: #{tpu_custom_call.1} parent=1 // pred_fallthru
      _
    %s55 = sadd.s32 0, 0
    %s56 = smul.u32 2, %s55
    %s57 = sadd.s32 0, 0
    %s58 = smul.u32 2, %s57
    %p59 = scmp.eq.s32.totalorder 0, 0
    // Predicated region
    $region18: #{tpu_custom_call.1} parent=1 // pred_check
      %p60 = pneg %p59
    $region19: #{tpu_custom_call.1} parent=1 // pred_check_branch
      %62 = sbr.rel (%p60) target = $region21
    $region20: #{tpu_custom_call.1} parent=1 // pred_region
      %63 = vst [vmem:[#allocation7] sm:$0xff] 0.0
      %64 = vst [vmem:[#allocation8] sm:$0xff] 0.0
    $region21: #{tpu_custom_call.1} parent=1 // pred_fallthru
      _
    %v65 = vld [vmem:[#allocation2] sm:$0xff]
    %v66 = vld [vmem:[#allocation2 + $0x8] sm:$0xff]
    %v67 = vld [vmem:[#allocation5] sm:$0xff]
    %v68 = vld [vmem:[#allocation5 + $0x8] sm:$0xff]
    %vm69 = vcmp.ne.f32.partialorder %v67, 0.0
    %vm70 = vcmp.ne.f32.partialorder %v68, 0.0
    %v71 = vand.u32 2147483647, %v67
    %v72 = vand.u32 2147483647, %v68
    %v73 = vsel %vm69, %v71, 1.0
    %v74 = vsel %vm70, %v72, 1.0
    %v75 = vrcp.pop %v73
    %v76 = vrcp.pop %v74
    %v77 = vmul.f32 %v73, %v75
    %v78 = vmul.f32 %v74, %v76
    %v79 = vsub.f32 2.0, %v77
    %v80 = vsub.f32 2.0, %v78
    %v81 = vmul.f32 %v75, %v79
    %v82 = vmul.f32 %v76, %v80
    %v83 = vsub.f32 %v65, %v67
    %v84 = vsub.f32 %v66, %v68
    %v85 = vand.u32 2147483647, %v83
    %v86 = vand.u32 2147483647, %v84
    %v87 = vmul.f32 %v85, %v81
    %v88 = vmul.f32 %v86, %v82
    %v89 = vsel %vm69, %v87, 0.0
    %v90 = vsel %vm70, %v88, 0.0
    %v91 = vsel %vm69, 1.0, 0.0
    %v92 = vsel %vm70, 1.0, 0.0
    %v93 = vld [vmem:[#allocation7] sm:$0xff]
    %v94 = vadd.f32 %v89, %v90
    %v95 = vadd.f32 %v93, %v94
    %96 = vst [vmem:[#allocation7] sm:$0xff] %v95
    %v97 = vld [vmem:[#allocation8] sm:$0xff]
    %v98 = vadd.f32 %v91, %v92
    %v99 = vadd.f32 %v97, %v98
    %100 = vst [vmem:[#allocation8] sm:$0xff] %v99
    // Predicated region
    $region22: #{tpu_custom_call.1} parent=1 // pred_check
      _
    $region23: #{tpu_custom_call.1} parent=1 // pred_check_branch
      %102 = sbr.rel (0) target = $region25
    $region24: #{tpu_custom_call.1} parent=1 // pred_region
      %104 = vsyncadd [#allocation4], 0
      %s106 = sshll.u32 [#allocation7], 4
      %s107 = int_to_ptr.vmem [resolvable:$true] %s106
      %s108 = sshll.u32 %s2, 4
      %s109 = int_to_ptr.hbm [resolvable:$true] %s108
      %111 = dma.vmem_to_hbm [thread:$0]  %s107, 128, %s109, [#allocation4]
    $region25: #{tpu_custom_call.1} parent=1 // pred_fallthru
      _
    // Predicated region
    $region26: #{tpu_custom_call.1} parent=1 // pred_check
      _
    $region27: #{tpu_custom_call.1} parent=1 // pred_check_branch
      %113 = sbr.rel (0) target = $region29
    $region28: #{tpu_custom_call.1} parent=1 // pred_region
      %115 = vsyncadd [#allocation9], 0
      %s117 = sshll.u32 [#allocation8], 4
      %s118 = int_to_ptr.vmem [resolvable:$true] %s117
      %s119 = sshll.u32 %s3, 4
      %s120 = int_to_ptr.hbm [resolvable:$true] %s119
      %122 = dma.vmem_to_hbm [thread:$0]  %s118, 128, %s120, [#allocation9]
    $region29: #{tpu_custom_call.1} parent=1 // pred_fallthru
      _
    // Predicated region
    $region30: #{tpu_custom_call.1} parent=1 // pred_check
      _
    $region31: #{tpu_custom_call.1} parent=1 // pred_check_branch
      %124 = sbr.rel (0) target = $region33
    $region32: #{tpu_custom_call.1} parent=1 // pred_region
      %126 = dma.done [#allocation4], 128
    $region33: #{tpu_custom_call.1} parent=1 // pred_fallthru
      _
    // Predicated region
    $region34: #{tpu_custom_call.1} parent=1 // pred_check
      _
    $region35: #{tpu_custom_call.1} parent=1 // pred_check_branch
      %128 = sbr.rel (0) target = $region37
    $region36: #{tpu_custom_call.1} parent=1 // pred_region
      %130 = dma.done [#allocation9], 128
    $region37: #{tpu_custom_call.1} parent=1 // pred_fallthru
      _
    %131 = vsyncpa [#allocation3], 1
    %132 = vsyncpa [#allocation6], 1
    %133 = vsyncpa [#allocation4], 1
    %134 = vsyncpa [#allocation9], 1

</llo_original>
